<compile_context>
chip_gen: v5e
topology: v5e:2x2
jax: 0.10.0
libtpu: 0.0.40
codegen_flags: <defaults>
</compile_context>

<pallas_src>
import jax
import jax.numpy as jnp
from jax.experimental import pallas as pl
from jax.experimental.pallas import tpu as pltpu


def rnn_fc_kernel(x_ref, wih0_ref, whh0_ref, b0_ref,
                  w1_ref, b1_ref, wfc_ref, bfc_ref, out_ref):
    B, T, D = x_ref.shape
    H = whh0_ref.shape[0]

    # ---- Prologue: hoisted layer-0 input projection for ALL timesteps. ----
    # One (B*T, D) @ (D, H) MXU pass instead of T tiny per-step ones.
    # (Leading-dim merge/split reshapes keep the (sublane, lane) layout intact.)
    x2d = x_ref[...].reshape(B * T, D)
    xp = jnp.dot(x2d, wih0_ref[...], preferred_element_type=jnp.float32)
    xp = (xp + b0_ref[...]).reshape(B, T, H)            # bias added once, outside loop

    whh0 = whh0_ref[...]                                 # (H, H)
    w1 = w1_ref[...]                                     # (2H, H) = [W_ih1; W_hh1]
    b1 = jnp.broadcast_to(b1_ref[...], (B, H))           # hoisted broadcast

    h0 = jnp.zeros((B, H), jnp.float32)                  # h_0 = None in PyTorch
    h1 = jnp.zeros((B, H), jnp.float32)

    # ---- Recurrence: fully unrolled (T static & tiny) -> static slices. ----
    for t in range(T):
        # Layer 0: only the recurrent matmul is left inside the loop.
        h0 = jnp.maximum(
            xp[:, t, :]
            + jnp.dot(h0, whh0, preferred_element_type=jnp.float32),
            0.0)
        # Layer 1: single fused matmul against the stacked (2H, H) weight.
        h01 = jnp.concatenate([h0, h1], axis=-1)          # (B, 2H)
        h1 = jnp.maximum(
            jnp.dot(h01, w1, preferred_element_type=jnp.float32) + b1,
            0.0)

    # ---- Final FC on the last timestep only. ----
    out_ref[...] = (
        jnp.dot(h1, wfc_ref[...], preferred_element_type=jnp.float32)
        + bfc_ref[...]
    ).astype(out_ref.dtype)


def rnn_fc_forward(x, kp):
    """x: (batch, seq, input_dim) float32; kp: packed params.
    Returns (batch, output_dim) float32."""
    B, T, D = x.shape
    O = kp["wfc"].shape[1]
    vmem = pl.BlockSpec(memory_space=pltpu.MemorySpace.VMEM)
    return pl.pallas_call(
        rnn_fc_kernel,
        out_shape=jax.ShapeDtypeStruct((B, O), jnp.float32),
        in_specs=[vmem] * 8,
        out_specs=vmem,
    )(x, kp["wih0"], kp["whh0"], kp["b0"],
      kp["w1"], kp["b1"], kp["wfc"], kp["bfc"])


def init_params(key, input_dim, hidden_dim, output_dim):
    """Deterministic init mimicking PyTorch's U(-1/sqrt(H), 1/sqrt(H)).
    Weights are stored pre-transposed as (in_features, out_features); the two
    per-layer biases are folded into one since they are simply added."""
    ks = jax.random.split(key, 10)
    s = 1.0 / jnp.sqrt(jnp.float32(hidden_dim))
    u = lambda k, shape: jax.random.uniform(k, shape, jnp.float32, -s, s)
    return {
        "wih0": u(ks[0], (input_dim, hidden_dim)),
        "whh0": u(ks[1], (hidden_dim, hidden_dim)),
        "b0":   u(ks[2], (1, hidden_dim)) + u(ks[3], (1, hidden_dim)),
        "wih1": u(ks[4], (hidden_dim, hidden_dim)),
        "whh1": u(ks[5], (hidden_dim, hidden_dim)),
        "b1":   u(ks[6], (1, hidden_dim)) + u(ks[7], (1, hidden_dim)),
        "wfc":  u(ks[8], (hidden_dim, output_dim)),
        "bfc":  u(ks[9], (1, output_dim)),
    }


def pack_params(p):
    """One-time kernel weight-layout prep: stack layer-1 weights into (2H, H)
    so the kernel does a single fused matmul on [h0 | h1]."""
    return {
        "wih0": p["wih0"], "whh0": p["whh0"], "b0": p["b0"],
        "w1": jnp.concatenate([p["wih1"], p["whh1"]], axis=0),
        "b1": p["b1"], "wfc": p["wfc"], "bfc": p["bfc"],
    }


def rnn_fc_reference(x, p):
    """Pure-JAX reference (matches torch.nn.RNN relu, 2 layers, batch_first)."""
    B, T, D = x.shape
    H = p["wih0"].shape[1]
    h0 = jnp.zeros((B, H), jnp.float32)
    h1 = jnp.zeros((B, H), jnp.float32)

    def step(carry, xt):
        h0, h1 = carry
        h0 = jax.nn.relu(xt @ p["wih0"] + h0 @ p["whh0"] + p["b0"])
        h1 = jax.nn.relu(h0 @ p["wih1"] + h1 @ p["whh1"] + p["b1"])
        return (h0, h1), None

    (h0, h1), _ = jax.lax.scan(step, (h0, h1), jnp.transpose(x, (1, 0, 2)))
    return h1 @ p["wfc"] + p["bfc"]


if __name__ == "__main__":
    # Small shapes consistent with the module: MNIST-row RNN (input_dim=28),
    # hidden_dim=128, 2 layers, output_dim=10; batch=2, seq=8.
    batch, seq, input_dim = 2, 8, 28
    hidden_dim, output_dim = 128, 10

    key = jax.random.PRNGKey(0)
    kx, kp_key = jax.random.split(key)
    x = jax.random.normal(kx, (batch, seq, input_dim), dtype=jnp.float32)
    params = init_params(kp_key, input_dim, hidden_dim, output_dim)
    kparams = pack_params(params)   # one-time weight layout prep

    out = rnn_fc_forward(x, kparams)
    out = jax.block_until_ready(out)

    ref = rnn_fc_reference(x, params)
    assert out.shape == (batch, output_dim)
    assert jnp.allclose(out, ref, atol=1e-4, rtol=1e-4), (out, ref)

    print("KERNEL_OK")
</pallas_src>

<mosaic_0001>
module attributes {stable_mosaic.version = 11 : i64} {
  func.func @rnn_fc_kernel(%arg0: memref<2x8x28xf32, #tpu.memory_space<vmem>>, %arg1: memref<28x128xf32, #tpu.memory_space<vmem>>, %arg2: memref<128x128xf32, #tpu.memory_space<vmem>>, %arg3: memref<1x128xf32, #tpu.memory_space<vmem>>, %arg4: memref<256x128xf32, #tpu.memory_space<vmem>>, %arg5: memref<1x128xf32, #tpu.memory_space<vmem>>, %arg6: memref<128x10xf32, #tpu.memory_space<vmem>>, %arg7: memref<1x10xf32, #tpu.memory_space<vmem>>, %arg8: memref<2x10xf32, #tpu.memory_space<vmem>>) attributes {dimension_semantics = [], scalar_prefetch = 0 : i64, scratch_operands = 0 : i64, tpu.core_type = #tpu.core_type<tc>} {
    %c0 = arith.constant 0 : index
    %c0_0 = arith.constant 0 : index
    %c0_1 = arith.constant 0 : index
    %0 = vector.load %arg0[%c0, %c0_0, %c0_1] : memref<2x8x28xf32, #tpu.memory_space<vmem>>, vector<2x8x28xf32>
    %1 = vector.shape_cast %0 : vector<2x8x28xf32> to vector<16x28xf32>
    %c0_2 = arith.constant 0 : index
    %c0_3 = arith.constant 0 : index
    %2 = vector.load %arg1[%c0_2, %c0_3] : memref<28x128xf32, #tpu.memory_space<vmem>>, vector<28x128xf32>
    %cst = arith.constant dense<0.000000e+00> : vector<16x128xf32>
    %3 = tpu.matmul %1, %2, %cst {dimension_numbers = #tpu.dot_dimension_numbers<[1], [0], [0], [1], [0, 0, 1, 1], [], []>} : vector<16x28xf32>, vector<28x128xf32>, vector<16x128xf32> -> vector<16x128xf32>
    %c0_4 = arith.constant 0 : index
    %c0_5 = arith.constant 0 : index
    %4 = vector.load %arg3[%c0_4, %c0_5] : memref<1x128xf32, #tpu.memory_space<vmem>>, vector<1x128xf32>
    %5 = vector.broadcast %4 : vector<1x128xf32> to vector<16x128xf32>
    %6 = arith.addf %3, %5 : vector<16x128xf32>
    %7 = vector.shape_cast %6 : vector<16x128xf32> to vector<2x8x128xf32>
    %c0_6 = arith.constant 0 : index
    %c0_7 = arith.constant 0 : index
    %8 = vector.load %arg2[%c0_6, %c0_7] : memref<128x128xf32, #tpu.memory_space<vmem>>, vector<128x128xf32>
    %c0_8 = arith.constant 0 : index
    %c0_9 = arith.constant 0 : index
    %9 = vector.load %arg4[%c0_8, %c0_9] : memref<256x128xf32, #tpu.memory_space<vmem>>, vector<256x128xf32>
    %c0_10 = arith.constant 0 : index
    %c0_11 = arith.constant 0 : index
    %10 = vector.load %arg5[%c0_10, %c0_11] : memref<1x128xf32, #tpu.memory_space<vmem>>, vector<1x128xf32>
    %11 = vector.shape_cast %10 : vector<1x128xf32> to vector<1x128xf32>
    %12 = vector.broadcast %11 : vector<1x128xf32> to vector<2x128xf32>
    %cst_12 = arith.constant 0.000000e+00 : f32
    %13 = vector.broadcast %cst_12 : f32 to vector<2x128xf32>
    %cst_13 = arith.constant 0.000000e+00 : f32
    %14 = vector.broadcast %cst_13 : f32 to vector<2x128xf32>
    %15 = vector.extract_strided_slice %7 {offsets = [0, 0, 0], sizes = [2, 1, 128], strides = [1, 1, 1]} : vector<2x8x128xf32> to vector<2x1x128xf32>
    %16 = vector.shape_cast %15 : vector<2x1x128xf32> to vector<2x128xf32>
    %cst_14 = arith.constant dense<0.000000e+00> : vector<2x128xf32>
    %17 = tpu.matmul %13, %8, %cst_14 {dimension_numbers = #tpu.dot_dimension_numbers<[1], [0], [0], [1], [0, 0, 1, 1], [], []>} : vector<2x128xf32>, vector<128x128xf32>, vector<2x128xf32> -> vector<2x128xf32>
    %18 = arith.addf %16, %17 : vector<2x128xf32>
    %cst_15 = arith.constant 0.000000e+00 : f32
    %19 = vector.broadcast %cst_15 : f32 to vector<2x128xf32>
    %20 = arith.maximumf %18, %19 : vector<2x128xf32>
    %21 = tpu.concatenate %20, %14 in 1 : vector<2x128xf32>, vector<2x128xf32> -> vector<2x256xf32>
    %cst_16 = arith.constant dense<0.000000e+00> : vector<2x128xf32>
    %22 = tpu.matmul %21, %9, %cst_16 {dimension_numbers = #tpu.dot_dimension_numbers<[1], [0], [0], [1], [0, 0, 1, 1], [], []>} : vector<2x256xf32>, vector<256x128xf32>, vector<2x128xf32> -> vector<2x128xf32>
    %23 = arith.addf %22, %12 : vector<2x128xf32>
    %cst_17 = arith.constant 0.000000e+00 : f32
    %24 = vector.broadcast %cst_17 : f32 to vector<2x128xf32>
    %25 = arith.maximumf %23, %24 : vector<2x128xf32>
    %26 = vector.extract_strided_slice %7 {offsets = [0, 1, 0], sizes = [2, 1, 128], strides = [1, 1, 1]} : vector<2x8x128xf32> to vector<2x1x128xf32>
    %27 = vector.shape_cast %26 : vector<2x1x128xf32> to vector<2x128xf32>
    %cst_18 = arith.constant dense<0.000000e+00> : vector<2x128xf32>
    %28 = tpu.matmul %20, %8, %cst_18 {dimension_numbers = #tpu.dot_dimension_numbers<[1], [0], [0], [1], [0, 0, 1, 1], [], []>} : vector<2x128xf32>, vector<128x128xf32>, vector<2x128xf32> -> vector<2x128xf32>
    %29 = arith.addf %27, %28 : vector<2x128xf32>
    %cst_19 = arith.constant 0.000000e+00 : f32
    %30 = vector.broadcast %cst_19 : f32 to vector<2x128xf32>
    %31 = arith.maximumf %29, %30 : vector<2x128xf32>
    %32 = tpu.concatenate %31, %25 in 1 : vector<2x128xf32>, vector<2x128xf32> -> vector<2x256xf32>
    %cst_20 = arith.constant dense<0.000000e+00> : vector<2x128xf32>
    %33 = tpu.matmul %32, %9, %cst_20 {dimension_numbers = #tpu.dot_dimension_numbers<[1], [0], [0], [1], [0, 0, 1, 1], [], []>} : vector<2x256xf32>, vector<256x128xf32>, vector<2x128xf32> -> vector<2x128xf32>
    %34 = arith.addf %33, %12 : vector<2x128xf32>
    %cst_21 = arith.constant 0.000000e+00 : f32
    %35 = vector.broadcast %cst_21 : f32 to vector<2x128xf32>
    %36 = arith.maximumf %34, %35 : vector<2x128xf32>
    %37 = vector.extract_strided_slice %7 {offsets = [0, 2, 0], sizes = [2, 1, 128], strides = [1, 1, 1]} : vector<2x8x128xf32> to vector<2x1x128xf32>
    %38 = vector.shape_cast %37 : vector<2x1x128xf32> to vector<2x128xf32>
    %cst_22 = arith.constant dense<0.000000e+00> : vector<2x128xf32>
    %39 = tpu.matmul %31, %8, %cst_22 {dimension_numbers = #tpu.dot_dimension_numbers<[1], [0], [0], [1], [0, 0, 1, 1], [], []>} : vector<2x128xf32>, vector<128x128xf32>, vector<2x128xf32> -> vector<2x128xf32>
    %40 = arith.addf %38, %39 : vector<2x128xf32>
    %cst_23 = arith.constant 0.000000e+00 : f32
    %41 = vector.broadcast %cst_23 : f32 to vector<2x128xf32>
    %42 = arith.maximumf %40, %41 : vector<2x128xf32>
    %43 = tpu.concatenate %42, %36 in 1 : vector<2x128xf32>, vector<2x128xf32> -> vector<2x256xf32>
    %cst_24 = arith.constant dense<0.000000e+00> : vector<2x128xf32>
    %44 = tpu.matmul %43, %9, %cst_24 {dimension_numbers = #tpu.dot_dimension_numbers<[1], [0], [0], [1], [0, 0, 1, 1], [], []>} : vector<2x256xf32>, vector<256x128xf32>, vector<2x128xf32> -> vector<2x128xf32>
    %45 = arith.addf %44, %12 : vector<2x128xf32>
    %cst_25 = arith.constant 0.000000e+00 : f32
    %46 = vector.broadcast %cst_25 : f32 to vector<2x128xf32>
    %47 = arith.maximumf %45, %46 : vector<2x128xf32>
    %48 = vector.extract_strided_slice %7 {offsets = [0, 3, 0], sizes = [2, 1, 128], strides = [1, 1, 1]} : vector<2x8x128xf32> to vector<2x1x128xf32>
    %49 = vector.shape_cast %48 : vector<2x1x128xf32> to vector<2x128xf32>
    %cst_26 = arith.constant dense<0.000000e+00> : vector<2x128xf32>
    %50 = tpu.matmul %42, %8, %cst_26 {dimension_numbers = #tpu.dot_dimension_numbers<[1], [0], [0], [1], [0, 0, 1, 1], [], []>} : vector<2x128xf32>, vector<128x128xf32>, vector<2x128xf32> -> vector<2x128xf32>
    %51 = arith.addf %49, %50 : vector<2x128xf32>
    %cst_27 = arith.constant 0.000000e+00 : f32
    %52 = vector.broadcast %cst_27 : f32 to vector<2x128xf32>
    %53 = arith.maximumf %51, %52 : vector<2x128xf32>
    %54 = tpu.concatenate %53, %47 in 1 : vector<2x128xf32>, vector<2x128xf32> -> vector<2x256xf32>
    %cst_28 = arith.constant dense<0.000000e+00> : vector<2x128xf32>
    %55 = tpu.matmul %54, %9, %cst_28 {dimension_numbers = #tpu.dot_dimension_numbers<[1], [0], [0], [1], [0, 0, 1, 1], [], []>} : vector<2x256xf32>, vector<256x128xf32>, vector<2x128xf32> -> vector<2x128xf32>
    %56 = arith.addf %55, %12 : vector<2x128xf32>
    %cst_29 = arith.constant 0.000000e+00 : f32
    %57 = vector.broadcast %cst_29 : f32 to vector<2x128xf32>
    %58 = arith.maximumf %56, %57 : vector<2x128xf32>
    %59 = vector.extract_strided_slice %7 {offsets = [0, 4, 0], sizes = [2, 1, 128], strides = [1, 1, 1]} : vector<2x8x128xf32> to vector<2x1x128xf32>
    %60 = vector.shape_cast %59 : vector<2x1x128xf32> to vector<2x128xf32>
    %cst_30 = arith.constant dense<0.000000e+00> : vector<2x128xf32>
    %61 = tpu.matmul %53, %8, %cst_30 {dimension_numbers = #tpu.dot_dimension_numbers<[1], [0], [0], [1], [0, 0, 1, 1], [], []>} : vector<2x128xf32>, vector<128x128xf32>, vector<2x128xf32> -> vector<2x128xf32>
    %62 = arith.addf %60, %61 : vector<2x128xf32>
    %cst_31 = arith.constant 0.000000e+00 : f32
    %63 = vector.broadcast %cst_31 : f32 to vector<2x128xf32>
    %64 = arith.maximumf %62, %63 : vector<2x128xf32>
    %65 = tpu.concatenate %64, %58 in 1 : vector<2x128xf32>, vector<2x128xf32> -> vector<2x256xf32>
    %cst_32 = arith.constant dense<0.000000e+00> : vector<2x128xf32>
    %66 = tpu.matmul %65, %9, %cst_32 {dimension_numbers = #tpu.dot_dimension_numbers<[1], [0], [0], [1], [0, 0, 1, 1], [], []>} : vector<2x256xf32>, vector<256x128xf32>, vector<2x128xf32> -> vector<2x128xf32>
    %67 = arith.addf %66, %12 : vector<2x128xf32>
    %cst_33 = arith.constant 0.000000e+00 : f32
    %68 = vector.broadcast %cst_33 : f32 to vector<2x128xf32>
    %69 = arith.maximumf %67, %68 : vector<2x128xf32>
    %70 = vector.extract_strided_slice %7 {offsets = [0, 5, 0], sizes = [2, 1, 128], strides = [1, 1, 1]} : vector<2x8x128xf32> to vector<2x1x128xf32>
    %71 = vector.shape_cast %70 : vector<2x1x128xf32> to vector<2x128xf32>
    %cst_34 = arith.constant dense<0.000000e+00> : vector<2x128xf32>
    %72 = tpu.matmul %64, %8, %cst_34 {dimension_numbers = #tpu.dot_dimension_numbers<[1], [0], [0], [1], [0, 0, 1, 1], [], []>} : vector<2x128xf32>, vector<128x128xf32>, vector<2x128xf32> -> vector<2x128xf32>
    %73 = arith.addf %71, %72 : vector<2x128xf32>
    %cst_35 = arith.constant 0.000000e+00 : f32
    %74 = vector.broadcast %cst_35 : f32 to vector<2x128xf32>
    %75 = arith.maximumf %73, %74 : vector<2x128xf32>
    %76 = tpu.concatenate %75, %69 in 1 : vector<2x128xf32>, vector<2x128xf32> -> vector<2x256xf32>
    %cst_36 = arith.constant dense<0.000000e+00> : vector<2x128xf32>
    %77 = tpu.matmul %76, %9, %cst_36 {dimension_numbers = #tpu.dot_dimension_numbers<[1], [0], [0], [1], [0, 0, 1, 1], [], []>} : vector<2x256xf32>, vector<256x128xf32>, vector<2x128xf32> -> vector<2x128xf32>
    %78 = arith.addf %77, %12 : vector<2x128xf32>
    %cst_37 = arith.constant 0.000000e+00 : f32
    %79 = vector.broadcast %cst_37 : f32 to vector<2x128xf32>
    %80 = arith.maximumf %78, %79 : vector<2x128xf32>
    %81 = vector.extract_strided_slice %7 {offsets = [0, 6, 0], sizes = [2, 1, 128], strides = [1, 1, 1]} : vector<2x8x128xf32> to vector<2x1x128xf32>
    %82 = vector.shape_cast %81 : vector<2x1x128xf32> to vector<2x128xf32>
    %cst_38 = arith.constant dense<0.000000e+00> : vector<2x128xf32>
    %83 = tpu.matmul %75, %8, %cst_38 {dimension_numbers = #tpu.dot_dimension_numbers<[1], [0], [0], [1], [0, 0, 1, 1], [], []>} : vector<2x128xf32>, vector<128x128xf32>, vector<2x128xf32> -> vector<2x128xf32>
    %84 = arith.addf %82, %83 : vector<2x128xf32>
    %cst_39 = arith.constant 0.000000e+00 : f32
    %85 = vector.broadcast %cst_39 : f32 to vector<2x128xf32>
    %86 = arith.maximumf %84, %85 : vector<2x128xf32>
    %87 = tpu.concatenate %86, %80 in 1 : vector<2x128xf32>, vector<2x128xf32> -> vector<2x256xf32>
    %cst_40 = arith.constant dense<0.000000e+00> : vector<2x128xf32>
    %88 = tpu.matmul %87, %9, %cst_40 {dimension_numbers = #tpu.dot_dimension_numbers<[1], [0], [0], [1], [0, 0, 1, 1], [], []>} : vector<2x256xf32>, vector<256x128xf32>, vector<2x128xf32> -> vector<2x128xf32>
    %89 = arith.addf %88, %12 : vector<2x128xf32>
    %cst_41 = arith.constant 0.000000e+00 : f32
    %90 = vector.broadcast %cst_41 : f32 to vector<2x128xf32>
    %91 = arith.maximumf %89, %90 : vector<2x128xf32>
    %92 = vector.extract_strided_slice %7 {offsets = [0, 7, 0], sizes = [2, 1, 128], strides = [1, 1, 1]} : vector<2x8x128xf32> to vector<2x1x128xf32>
    %93 = vector.shape_cast %92 : vector<2x1x128xf32> to vector<2x128xf32>
    %cst_42 = arith.constant dense<0.000000e+00> : vector<2x128xf32>
    %94 = tpu.matmul %86, %8, %cst_42 {dimension_numbers = #tpu.dot_dimension_numbers<[1], [0], [0], [1], [0, 0, 1, 1], [], []>} : vector<2x128xf32>, vector<128x128xf32>, vector<2x128xf32> -> vector<2x128xf32>
    %95 = arith.addf %93, %94 : vector<2x128xf32>
    %cst_43 = arith.constant 0.000000e+00 : f32
    %96 = vector.broadcast %cst_43 : f32 to vector<2x128xf32>
    %97 = arith.maximumf %95, %96 : vector<2x128xf32>
    %98 = tpu.concatenate %97, %91 in 1 : vector<2x128xf32>, vector<2x128xf32> -> vector<2x256xf32>
    %cst_44 = arith.constant dense<0.000000e+00> : vector<2x128xf32>
    %99 = tpu.matmul %98, %9, %cst_44 {dimension_numbers = #tpu.dot_dimension_numbers<[1], [0], [0], [1], [0, 0, 1, 1], [], []>} : vector<2x256xf32>, vector<256x128xf32>, vector<2x128xf32> -> vector<2x128xf32>
    %100 = arith.addf %99, %12 : vector<2x128xf32>
    %cst_45 = arith.constant 0.000000e+00 : f32
    %101 = vector.broadcast %cst_45 : f32 to vector<2x128xf32>
    %102 = arith.maximumf %100, %101 : vector<2x128xf32>
    %c0_46 = arith.constant 0 : index
    %c0_47 = arith.constant 0 : index
    %103 = vector.load %arg6[%c0_46, %c0_47] : memref<128x10xf32, #tpu.memory_space<vmem>>, vector<128x10xf32>
    %cst_48 = arith.constant dense<0.000000e+00> : vector<2x10xf32>
    %104 = tpu.matmul %102, %103, %cst_48 {dimension_numbers = #tpu.dot_dimension_numbers<[1], [0], [0], [1], [0, 0, 1, 1], [], []>} : vector<2x128xf32>, vector<128x10xf32>, vector<2x10xf32> -> vector<2x10xf32>
    %c0_49 = arith.constant 0 : index
    %c0_50 = arith.constant 0 : index
    %105 = vector.load %arg7[%c0_49, %c0_50] : memref<1x10xf32, #tpu.memory_space<vmem>>, vector<1x10xf32>
    %106 = vector.broadcast %105 : vector<1x10xf32> to vector<2x10xf32>
    %107 = arith.addf %104, %106 : vector<2x10xf32>
    %c0_51 = arith.constant 0 : index
    %c0_52 = arith.constant 0 : index
    %108 = vector.load %arg8[%c0_51, %c0_52] : memref<2x10xf32, #tpu.memory_space<vmem>>, vector<2x10xf32>
    tpu.vector_store %arg8[%c0_51, %c0_52], %107 {strides = array<i32>} : memref<2x10xf32, #tpu.memory_space<vmem>>, vector<2x10xf32>,
    return
  }
}

</mosaic_0001>

<llo_original>
// kernel: tpu_custom_call.1
$region0: #{tpu_custom_call.1}
  #allocation0 [shape = 'u32[]', space=smem, size = 0x4, offset = 0x4, fixed_abs, tag = 'smem constant byte address 0x4 - core index']
  #allocation1 [shape = 'u32[72,128]{1,0:T(1,128)}', space=vmem, size = 0x9000, scoped, tag = 'internal scratch']
  %s0 = inlined_call_operand.vmem [shape: f32[2,8,28], index: 0, kind: input, shape index: {}]
  %s1 = inlined_call_operand.hbm [shape: f32[28,128], index: 1, kind: input, shape index: {}]
  %s2 = inlined_call_operand.vmem [shape: f32[128,128], index: 2, kind: input, shape index: {}]
  %s3 = inlined_call_operand.vmem [shape: f32[1,128], index: 3, kind: input, shape index: {}]
  %s4 = inlined_call_operand.hbm [shape: f32[256,128], index: 4, kind: input, shape index: {}]
  %s5 = inlined_call_operand.vmem [shape: f32[1,128], index: 5, kind: input, shape index: {}]
  %s6 = inlined_call_operand.vmem [shape: f32[128,10], index: 6, kind: input, shape index: {}]
  %s7 = inlined_call_operand.vmem [shape: f32[1,10], index: 7, kind: input, shape index: {}]
  %s8 = inlined_call_operand.hbm [shape: f32[2,10], index: 8, kind: output, shape index: {}]
  %s9 = sld [smem:[#allocation0]]
  $region50: #{tpu_custom_call.1} parent=0
    _
  %s11 = ssub.s32 1, %s9
  %s12 = scalar_select 0, %s11, %s9
  $region1: #{tpu_custom_call.1} parent=0
    #allocation2 [shape = 'u8[16384]{0}', space=vmem, size = 0x4000, scoped, tag = 'input window, operand 1, single buffered']
    #allocation3 [shape = 's32[1]{0}', space=sflag, size = 0x4, scoped, tag = 'scoped memory for tpu_custom_call.1']
    #allocation4 [shape = 's32[1]{0}', space=sflag, size = 0x4, scoped, tag = 'scoped memory for tpu_custom_call.1']
    #allocation5 [shape = 'u8[131072]{0}', space=vmem, size = 0x20000, scoped, tag = 'input window, operand 4, single buffered']
    #allocation6 [shape = 's32[1]{0}', space=sflag, size = 0x4, scoped, tag = 'scoped memory for tpu_custom_call.1']
    #allocation7 [shape = 'u8[1024]{0}', space=vmem, size = 0x400, scoped, tag = 'output window, operand 0, single buffered']
    %13 = vsyncpa [#allocation3], 0
    %14 = vsyncpa [#allocation6], 0
    %15 = vsyncpa [#allocation4], 0
    // Predicated region
    $region2: #{tpu_custom_call.1} parent=1 // pred_check
      _
    $region3: #{tpu_custom_call.1} parent=1 // pred_check_branch
      %17 = sbr.rel (0) target = $region5
    $region4: #{tpu_custom_call.1} parent=1 // pred_region
      _
    $region5: #{tpu_custom_call.1} parent=1 // pred_fallthru
      _
    // Predicated region
    $region6: #{tpu_custom_call.1} parent=1 // pred_check
      _
    $region7: #{tpu_custom_call.1} parent=1 // pred_check_branch
      %19 = sbr.rel (0) target = $region9
    $region8: #{tpu_custom_call.1} parent=1 // pred_region
      %21 = vsyncadd [#allocation3], 0
      %s22 = sshll.u32 %s1, 4
      %s23 = int_to_ptr.hbm [resolvable:$true] %s22
      %s24 = sshll.u32 [#allocation2], 4
      %s25 = int_to_ptr.vmem [resolvable:$true] %s24
      %30 = dma.hbm_to_vmem [thread:$0]  %s23, 512, %s25, [#allocation3], 128, 128, 8
    $region9: #{tpu_custom_call.1} parent=1 // pred_fallthru
      _
    // Predicated region
    $region10: #{tpu_custom_call.1} parent=1 // pred_check
      _
    $region11: #{tpu_custom_call.1} parent=1 // pred_check_branch
      %32 = sbr.rel (0) target = $region13
    $region12: #{tpu_custom_call.1} parent=1 // pred_region
      _
    $region13: #{tpu_custom_call.1} parent=1 // pred_fallthru
      _
    // Predicated region
    $region14: #{tpu_custom_call.1} parent=1 // pred_check
      _
    $region15: #{tpu_custom_call.1} parent=1 // pred_check_branch
      %34 = sbr.rel (0) target = $region17
    $region16: #{tpu_custom_call.1} parent=1 // pred_region
      _
    $region17: #{tpu_custom_call.1} parent=1 // pred_fallthru
      _
    // Predicated region
    $region18: #{tpu_custom_call.1} parent=1 // pred_check
      _
    $region19: #{tpu_custom_call.1} parent=1 // pred_check_branch
      %36 = sbr.rel (0) target = $region21
    $region20: #{tpu_custom_call.1} parent=1 // pred_region
      %38 = vsyncadd [#allocation6], 0
      %s39 = sshll.u32 %s4, 4
      %s40 = int_to_ptr.hbm [resolvable:$true] %s39
      %s41 = sshll.u32 [#allocation5], 4
      %s42 = int_to_ptr.vmem [resolvable:$true] %s41
      %47 = dma.hbm_to_vmem [thread:$0]  %s40, 4096, %s42, [#allocation6], 128, 128, 8
    $region21: #{tpu_custom_call.1} parent=1 // pred_fallthru
      _
    // Predicated region
    $region22: #{tpu_custom_call.1} parent=1 // pred_check
      _
    $region23: #{tpu_custom_call.1} parent=1 // pred_check_branch
      %49 = sbr.rel (0) target = $region25
    $region24: #{tpu_custom_call.1} parent=1 // pred_region
      _
    $region25: #{tpu_custom_call.1} parent=1 // pred_fallthru
      _
    // Predicated region
    $region26: #{tpu_custom_call.1} parent=1 // pred_check
      _
    $region27: #{tpu_custom_call.1} parent=1 // pred_check_branch
      %51 = sbr.rel (0) target = $region29
    $region28: #{tpu_custom_call.1} parent=1 // pred_region
      _
    $region29: #{tpu_custom_call.1} parent=1 // pred_fallthru
      _
    // Predicated region
    $region30: #{tpu_custom_call.1} parent=1 // pred_check
      _
    $region31: #{tpu_custom_call.1} parent=1 // pred_check_branch
      %53 = sbr.rel (0) target = $region33
    $region32: #{tpu_custom_call.1} parent=1 // pred_region
      _
    $region33: #{tpu_custom_call.1} parent=1 // pred_fallthru
      _
    // Predicated region
    $region34: #{tpu_custom_call.1} parent=1 // pred_check
      _
    $region35: #{tpu_custom_call.1} parent=1 // pred_check_branch
      %55 = sbr.rel (0) target = $region37
    $region36: #{tpu_custom_call.1} parent=1 // pred_region
      %57 = dma.done [#allocation3], 512
    $region37: #{tpu_custom_call.1} parent=1 // pred_fallthru
      _
    // Predicated region
    $region38: #{tpu_custom_call.1} parent=1 // pred_check
      _
    $region39: #{tpu_custom_call.1} parent=1 // pred_check_branch
      %59 = sbr.rel (0) target = $region41
    $region40: #{tpu_custom_call.1} parent=1 // pred_region
      %61 = dma.done [#allocation6], 4096
    $region41: #{tpu_custom_call.1} parent=1 // pred_fallthru
      _
    %v62 = vld [vmem:[%s0] sm:$0xff]
    %v63 = vld [vmem:[%s0 + $0x8] sm:$0xff]
    %v64 = vld [vmem:[#allocation2] sm:$0xff]
    %v65 = vld [vmem:[#allocation2 + $0x8] sm:$0xff]
    %v66 = vld [vmem:[#allocation2 + $0x10] sm:$0xff]
    %v67 = vld [vmem:[#allocation2 + $0x18] sm:$0xf]
    %v68 = vld [vmem:[%s3] sm:$0x1]
    %v70 = vperm.slane %v68, 0
    %vm72 = vcmask 228352
    %v74 = vsel %vm72, %v62, 0
    %v77 = vsel %vm72, %v63, 0
    %vm79 = vcmask 1043456
    %v81 = vsel %vm79, %v67, 0
    %83 = vmatpush.msra.mxu0 0.0
    %84 = vmatpush.msra.mxu0 0.0
    %85 = vmatpush.msra.mxu0 0.0
    %86 = vmatpush.msra.mxu0 0.0
    %87 = vmatpush.msra.mxu0 0.0
    %88 = vmatpush.msra.mxu0 0.0
    %89 = vmatpush.msra.mxu0 0.0
    %90 = vmatpush.msra.mxu0 0.0
    %91 = vmatpush.msra.mxu0 0.0
    %92 = vmatpush.msra.mxu0 0.0
    %93 = vmatpush.msra.mxu0 0.0
    %94 = vmatpush.msra.mxu0 0.0
    %95 = vmatpush.msra.mxu0 %v81
    %96 = vmatpush.msra.mxu0 %v66
    %97 = vmatpush.msra.mxu0 %v65
    %98 = vmatpush.msra.mxu0 %v64
    %99 = vmatmul.f32.gmra.mxu0 %v74
    %v100 = vpop.f32.mrf.mxu0
    %v101 = vadd.f32 %v70, %v100
    %102 = vmatmul.f32.gmra.mxu0 %v77
    %v103 = vpop.f32.mrf.mxu0
    %v104 = vadd.f32 %v70, %v103
    %105 = vdwg.mxu0
    %v106 = vld [vmem:[%s2] sm:$0xff]
    %v107 = vld [vmem:[%s2 + $0x8] sm:$0xff]
    %v108 = vld [vmem:[%s2 + $0x10] sm:$0xff]
    %v109 = vld [vmem:[%s2 + $0x18] sm:$0xff]
    %v110 = vld [vmem:[%s2 + $0x20] sm:$0xff]
    %v111 = vld [vmem:[%s2 + $0x28] sm:$0xff]
    %v112 = vld [vmem:[%s2 + $0x30] sm:$0xff]
    %v113 = vld [vmem:[%s2 + $0x38] sm:$0xff]
    %v114 = vld [vmem:[%s2 + $0x40] sm:$0xff]
    %v115 = vld [vmem:[%s2 + $0x48] sm:$0xff]
    %v116 = vld [vmem:[%s2 + $0x50] sm:$0xff]
    %v117 = vld [vmem:[%s2 + $0x58] sm:$0xff]
    %v118 = vld [vmem:[%s2 + $0x60] sm:$0xff]
    %v119 = vld [vmem:[%s2 + $0x68] sm:$0xff]
    %v120 = vld [vmem:[%s2 + $0x70] sm:$0xff]
    %v121 = vld [vmem:[%s2 + $0x78] sm:$0xff]
    %v122 = vld [vmem:[#allocation5] sm:$0xff]
    %v123 = vld [vmem:[#allocation5 + $0x8] sm:$0xff]
    %v124 = vld [vmem:[#allocation5 + $0x10] sm:$0xff]
    %v125 = vld [vmem:[#allocation5 + $0x18] sm:$0xff]
    %v126 = vld [vmem:[#allocation5 + $0x20] sm:$0xff]
    %v127 = vld [vmem:[#allocation5 + $0x28] sm:$0xff]
    %v128 = vld [vmem:[#allocation5 + $0x30] sm:$0xff]
    %v129 = vld [vmem:[#allocation5 + $0x38] sm:$0xff]
    %v130 = vld [vmem:[#allocation5 + $0x40] sm:$0xff]
    %v131 = vld [vmem:[#allocation5 + $0x48] sm:$0xff]
    %v132 = vld [vmem:[#allocation5 + $0x50] sm:$0xff]
    %v133 = vld [vmem:[#allocation5 + $0x58] sm:$0xff]
    %v134 = vld [vmem:[#allocation5 + $0x60] sm:$0xff]
    %v135 = vld [vmem:[#allocation5 + $0x68] sm:$0xff]
    %v136 = vld [vmem:[#allocation5 + $0x70] sm:$0xff]
    %v137 = vld [vmem:[#allocation5 + $0x78] sm:$0xff]
    %v138 = vld [vmem:[#allocation5 + $0x80] sm:$0xff]
    %v139 = vld [vmem:[#allocation5 + $0x88] sm:$0xff]
    %v140 = vld [vmem:[#allocation5 + $0x90] sm:$0xff]
    %v141 = vld [vmem:[#allocation5 + $0x98] sm:$0xff]
    %v142 = vld [vmem:[#allocation5 + $0xa0] sm:$0xff]
    %v143 = vld [vmem:[#allocation5 + $0xa8] sm:$0xff]
    %v144 = vld [vmem:[#allocation5 + $0xb0] sm:$0xff]
    %v145 = vld [vmem:[#allocation5 + $0xb8] sm:$0xff]
    %v146 = vld [vmem:[#allocation5 + $0xc0] sm:$0xff]
    %v147 = vld [vmem:[#allocation5 + $0xc8] sm:$0xff]
    %v148 = vld [vmem:[#allocation5 + $0xd0] sm:$0xff]
    %v149 = vld [vmem:[#allocation5 + $0xd8] sm:$0xff]
    %v150 = vld [vmem:[#allocation5 + $0xe0] sm:$0xff]
    %v151 = vld [vmem:[#allocation5 + $0xe8] sm:$0xff]
    %v152 = vld [vmem:[#allocation5 + $0xf0] sm:$0xff]
    %v153 = vld [vmem:[#allocation5 + $0xf8] sm:$0xff]
    %v154 = vld [vmem:[%s5] sm:$0x1]
    %v156 = vperm.slane %v154, 0
    %158 = vmatpush.msra.mxu0 %v121
    %159 = vmatpush.msra.mxu0 %v120
    %160 = vmatpush.msra.mxu0 %v119
    %161 = vmatpush.msra.mxu0 %v118
    %162 = vmatpush.msra.mxu0 %v117
    %163 = vmatpush.msra.mxu0 %v116
    %164 = vmatpush.msra.mxu0 %v115
    %165 = vmatpush.msra.mxu0 %v114
    %166 = vmatpush.msra.mxu0 %v113
    %167 = vmatpush.msra.mxu0 %v112
    %168 = vmatpush.msra.mxu0 %v111
    %169 = vmatpush.msra.mxu0 %v110
    %170 = vmatpush.msra.mxu0 %v109
    %171 = vmatpush.msra.mxu0 %v108
    %172 = vmatpush.msra.mxu0 %v107
    %173 = vmatpush.msra.mxu0 %v106
    %174 = vmatmul.f32.gmra.mxu0 0.0
    %v175 = vpop.f32.mrf.mxu0
    %v176 = vadd.f32 0.0, %v175
    %177 = vdwg.mxu0
    %v179 = vrot.slane %v176, 1
    %v182 = vadd.f32 %v101, %v176
    %v183 = vadd.f32 %v104, %v179
    %v184 = vmax.f32 %v182, 0.0
    %v185 = vmax.f32 %v183, 0.0
    %v188 = vrot.slane %v185, 7
    %vm189 = vcmask 1041409
    %v190 = vsel %vm189, %v188, %v184
    %192 = vmatpush.msra.mxu0 %v137
    %193 = vmatpush.msra.mxu0 %v136
    %194 = vmatpush.msra.mxu0 %v135
    %195 = vmatpush.msra.mxu0 %v134
    %196 = vmatpush.msra.mxu0 %v133
    %197 = vmatpush.msra.mxu0 %v132
    %198 = vmatpush.msra.mxu0 %v131
    %199 = vmatpush.msra.mxu0 %v130
    %200 = vmatpush.msra.mxu0 %v129
    %201 = vmatpush.msra.mxu0 %v128
    %202 = vmatpush.msra.mxu0 %v127
    %203 = vmatpush.msra.mxu0 %v126
    %204 = vmatpush.msra.mxu0 %v125
    %205 = vmatpush.msra.mxu0 %v124
    %206 = vmatpush.msra.mxu0 %v123
    %207 = vmatpush.msra.mxu0 %v122
    %208 = vmatmul.f32.gmra.mxu0 %v190
    %v209 = vpop.f32.mrf.mxu0
    %v210 = vadd.f32 %v156, %v209
    %211 = vdwg.mxu0
    %212 = vmatpush.msra.mxu0 %v153
    %213 = vmatpush.msra.mxu0 %v152
    %214 = vmatpush.msra.mxu0 %v151
    %215 = vmatpush.msra.mxu0 %v150
    %216 = vmatpush.msra.mxu0 %v149
    %217 = vmatpush.msra.mxu0 %v148
    %218 = vmatpush.msra.mxu0 %v147
    %219 = vmatpush.msra.mxu0 %v146
    %220 = vmatpush.msra.mxu0 %v145
    %221 = vmatpush.msra.mxu0 %v144
    %222 = vmatpush.msra.mxu0 %v143
    %223 = vmatpush.msra.mxu0 %v142
    %224 = vmatpush.msra.mxu0 %v141
    %225 = vmatpush.msra.mxu0 %v140
    %226 = vmatpush.msra.mxu0 %v139
    %227 = vmatpush.msra.mxu0 %v138
    %228 = vmatmul.f32.gmra.mxu0 0.0
    %v229 = vpop.f32.mrf.mxu0
    %v230 = vadd.f32 %v210, %v229
    %231 = vdwg.mxu0
    %v232 = vmax.f32 %v230, 0.0
    %233 = vmatpush.msra.mxu0 %v121
    %234 = vmatpush.msra.mxu0 %v120
    %235 = vmatpush.msra.mxu0 %v119
    %236 = vmatpush.msra.mxu0 %v118
    %237 = vmatpush.msra.mxu0 %v117
    %238 = vmatpush.msra.mxu0 %v116
    %239 = vmatpush.msra.mxu0 %v115
    %240 = vmatpush.msra.mxu0 %v114
    %241 = vmatpush.msra.mxu0 %v113
    %242 = vmatpush.msra.mxu0 %v112
    %243 = vmatpush.msra.mxu0 %v111
    %244 = vmatpush.msra.mxu0 %v110
    %245 = vmatpush.msra.mxu0 %v109
    %246 = vmatpush.msra.mxu0 %v108
    %247 = vmatpush.msra.mxu0 %v107
    %248 = vmatpush.msra.mxu0 %v106
    %249 = vmatmul.f32.gmra.mxu0 %v190
    %v250 = vpop.f32.mrf.mxu0
    %v251 = vadd.f32 0.0, %v250
    %252 = vdwg.mxu0
    %v254 = vrot.slane %v251, 7
    %v257 = vadd.f32 %v101, %v254
    %v258 = vadd.f32 %v104, %v251
    %v259 = vmax.f32 %v257, 0.0
    %v260 = vmax.f32 %v258, 0.0
    %v263 = vrot.slane %v260, 7
    %vm264 = vcmask 1042434
    %v265 = vsel %vm264, %v263, %v259
    %v267 = vrot.slane %v232, 7
    %v268 = vrot.slane %v265, 1
    %v269 = vrot.slane %v267, 1
    %272 = vmatpush.msra.mxu0 %v137
    %273 = vmatpush.msra.mxu0 %v136
    %274 = vmatpush.msra.mxu0 %v135
    %275 = vmatpush.msra.mxu0 %v134
    %276 = vmatpush.msra.mxu0 %v133
    %277 = vmatpush.msra.mxu0 %v132
    %278 = vmatpush.msra.mxu0 %v131
    %279 = vmatpush.msra.mxu0 %v130
    %280 = vmatpush.msra.mxu0 %v129
    %281 = vmatpush.msra.mxu0 %v128
    %282 = vmatpush.msra.mxu0 %v127
    %283 = vmatpush.msra.mxu0 %v126
    %284 = vmatpush.msra.mxu0 %v125
    %285 = vmatpush.msra.mxu0 %v124
    %286 = vmatpush.msra.mxu0 %v123
    %287 = vmatpush.msra.mxu0 %v122
    %288 = vmatmul.f32.gmra.mxu0 %v268
    %v289 = vpop.f32.mrf.mxu0
    %v290 = vadd.f32 %v156, %v289
    %291 = vdwg.mxu0
    %292 = vmatpush.msra.mxu0 %v153
    %293 = vmatpush.msra.mxu0 %v152
    %294 = vmatpush.msra.mxu0 %v151
    %295 = vmatpush.msra.mxu0 %v150
    %296 = vmatpush.msra.mxu0 %v149
    %297 = vmatpush.msra.mxu0 %v148
    %298 = vmatpush.msra.mxu0 %v147
    %299 = vmatpush.msra.mxu0 %v146
    %300 = vmatpush.msra.mxu0 %v145
    %301 = vmatpush.msra.mxu0 %v144
    %302 = vmatpush.msra.mxu0 %v143
    %303 = vmatpush.msra.mxu0 %v142
    %304 = vmatpush.msra.mxu0 %v141
    %305 = vmatpush.msra.mxu0 %v140
    %306 = vmatpush.msra.mxu0 %v139
    %307 = vmatpush.msra.mxu0 %v138
    %308 = vmatmul.f32.gmra.mxu0 %v269
    %v309 = vpop.f32.mrf.mxu0
    %v310 = vadd.f32 %v290, %v309
    %311 = vdwg.mxu0
    %v312 = vmax.f32 %v310, 0.0
    %v313 = vrot.slane %v259, 1
    %v314 = vsel %vm189, %v260, %v313
    %316 = vmatpush.msra.mxu0 %v121
    %317 = vmatpush.msra.mxu0 %v120
    %318 = vmatpush.msra.mxu0 %v119
    %319 = vmatpush.msra.mxu0 %v118
    %320 = vmatpush.msra.mxu0 %v117
    %321 = vmatpush.msra.mxu0 %v116
    %322 = vmatpush.msra.mxu0 %v115
    %323 = vmatpush.msra.mxu0 %v114
    %324 = vmatpush.msra.mxu0 %v113
    %325 = vmatpush.msra.mxu0 %v112
    %326 = vmatpush.msra.mxu0 %v111
    %327 = vmatpush.msra.mxu0 %v110
    %328 = vmatpush.msra.mxu0 %v109
    %329 = vmatpush.msra.mxu0 %v108
    %330 = vmatpush.msra.mxu0 %v107
    %331 = vmatpush.msra.mxu0 %v106
    %332 = vmatmul.f32.gmra.mxu0 %v314
    %v333 = vpop.f32.mrf.mxu0
    %v334 = vadd.f32 0.0, %v333
    %335 = vdwg.mxu0
    %v337 = vrot.slane %v334, 6
    %v338 = vrot.slane %v334, 7
    %v341 = vadd.f32 %v101, %v337
    %v342 = vadd.f32 %v104, %v338
    %v343 = vmax.f32 %v341, 0.0
    %v344 = vmax.f32 %v342, 0.0
    %v347 = vrot.slane %v344, 7
    %vm348 = vcmask 1043459
    %v349 = vsel %vm348, %v347, %v343
    %v351 = vrot.slane %v312, 6
    %v352 = vrot.slane %v349, 2
    %v353 = vrot.slane %v351, 2
    %356 = vmatpush.msra.mxu0 %v137
    %357 = vmatpush.msra.mxu0 %v136
    %358 = vmatpush.msra.mxu0 %v135
    %359 = vmatpush.msra.mxu0 %v134
    %360 = vmatpush.msra.mxu0 %v133
    %361 = vmatpush.msra.mxu0 %v132
    %362 = vmatpush.msra.mxu0 %v131
    %363 = vmatpush.msra.mxu0 %v130
    %364 = vmatpush.msra.mxu0 %v129
    %365 = vmatpush.msra.mxu0 %v128
    %366 = vmatpush.msra.mxu0 %v127
    %367 = vmatpush.msra.mxu0 %v126
    %368 = vmatpush.msra.mxu0 %v125
    %369 = vmatpush.msra.mxu0 %v124
    %370 = vmatpush.msra.mxu0 %v123
    %371 = vmatpush.msra.mxu0 %v122
    %372 = vmatmul.f32.gmra.mxu0 %v352
    %v373 = vpop.f32.mrf.mxu0
    %v374 = vadd.f32 %v156, %v373
    %375 = vdwg.mxu0
    %376 = vmatpush.msra.mxu0 %v153
    %377 = vmatpush.msra.mxu0 %v152
    %378 = vmatpush.msra.mxu0 %v151
    %379 = vmatpush.msra.mxu0 %v150
    %380 = vmatpush.msra.mxu0 %v149
    %381 = vmatpush.msra.mxu0 %v148
    %382 = vmatpush.msra.mxu0 %v147
    %383 = vmatpush.msra.mxu0 %v146
    %384 = vmatpush.msra.mxu0 %v145
    %385 = vmatpush.msra.mxu0 %v144
    %386 = vmatpush.msra.mxu0 %v143
    %387 = vmatpush.msra.mxu0 %v142
    %388 = vmatpush.msra.mxu0 %v141
    %389 = vmatpush.msra.mxu0 %v140
    %390 = vmatpush.msra.mxu0 %v139
    %391 = vmatpush.msra.mxu0 %v138
    %392 = vmatmul.f32.gmra.mxu0 %v353
    %v393 = vpop.f32.mrf.mxu0
    %v394 = vadd.f32 %v374, %v393
    %395 = vdwg.mxu0
    %v396 = vmax.f32 %v394, 0.0
    %v397 = vrot.slane %v343, 2
    %v398 = vrot.slane %v344, 1
    %v399 = vsel %vm189, %v398, %v397
    %401 = vmatpush.msra.mxu0 %v121
    %402 = vmatpush.msra.mxu0 %v120
    %403 = vmatpush.msra.mxu0 %v119
    %404 = vmatpush.msra.mxu0 %v118
    %405 = vmatpush.msra.mxu0 %v117
    %406 = vmatpush.msra.mxu0 %v116
    %407 = vmatpush.msra.mxu0 %v115
    %408 = vmatpush.msra.mxu0 %v114
    %409 = vmatpush.msra.mxu0 %v113
    %410 = vmatpush.msra.mxu0 %v112
    %411 = vmatpush.msra.mxu0 %v111
    %412 = vmatpush.msra.mxu0 %v110
    %413 = vmatpush.msra.mxu0 %v109
    %414 = vmatpush.msra.mxu0 %v108
    %415 = vmatpush.msra.mxu0 %v107
    %416 = vmatpush.msra.mxu0 %v106
    %417 = vmatmul.f32.gmra.mxu0 %v399
    %v418 = vpop.f32.mrf.mxu0
    %v419 = vadd.f32 0.0, %v418
    %420 = vdwg.mxu0
    %v422 = vrot.slane %v419, 5
    %v423 = vrot.slane %v419, 6
    %v426 = vadd.f32 %v101, %v422
    %v427 = vadd.f32 %v104, %v423
    %v428 = vmax.f32 %v426, 0.0
    %v429 = vmax.f32 %v427, 0.0
    %v432 = vrot.slane %v429, 7
    %vm433 = vcmask 1044484
    %v434 = vsel %vm433, %v432, %v428
    %v436 = vrot.slane %v396, 5
    %v437 = vrot.slane %v434, 3
    %v438 = vrot.slane %v436, 3
    %441 = vmatpush.msra.mxu0 %v137
    %442 = vmatpush.msra.mxu0 %v136
    %443 = vmatpush.msra.mxu0 %v135
    %444 = vmatpush.msra.mxu0 %v134
    %445 = vmatpush.msra.mxu0 %v133
    %446 = vmatpush.msra.mxu0 %v132
    %447 = vmatpush.msra.mxu0 %v131
    %448 = vmatpush.msra.mxu0 %v130
    %449 = vmatpush.msra.mxu0 %v129
    %450 = vmatpush.msra.mxu0 %v128
    %451 = vmatpush.msra.mxu0 %v127
    %452 = vmatpush.msra.mxu0 %v126
    %453 = vmatpush.msra.mxu0 %v125
    %454 = vmatpush.msra.mxu0 %v124
    %455 = vmatpush.msra.mxu0 %v123
    %456 = vmatpush.msra.mxu0 %v122
    %457 = vmatmul.f32.gmra.mxu0 %v437
    %v458 = vpop.f32.mrf.mxu0
    %v459 = vadd.f32 %v156, %v458
    %460 = vdwg.mxu0
    %461 = vmatpush.msra.mxu0 %v153
    %462 = vmatpush.msra.mxu0 %v152
    %463 = vmatpush.msra.mxu0 %v151
    %464 = vmatpush.msra.mxu0 %v150
    %465 = vmatpush.msra.mxu0 %v149
    %466 = vmatpush.msra.mxu0 %v148
    %467 = vmatpush.msra.mxu0 %v147
    %468 = vmatpush.msra.mxu0 %v146
    %469 = vmatpush.msra.mxu0 %v145
    %470 = vmatpush.msra.mxu0 %v144
    %471 = vmatpush.msra.mxu0 %v143
    %472 = vmatpush.msra.mxu0 %v142
    %473 = vmatpush.msra.mxu0 %v141
    %474 = vmatpush.msra.mxu0 %v140
    %475 = vmatpush.msra.mxu0 %v139
    %476 = vmatpush.msra.mxu0 %v138
    %477 = vmatmul.f32.gmra.mxu0 %v438
    %v478 = vpop.f32.mrf.mxu0
    %v479 = vadd.f32 %v459, %v478
    %480 = vdwg.mxu0
    %v481 = vmax.f32 %v479, 0.0
    %v482 = vrot.slane %v428, 3
    %v483 = vrot.slane %v429, 2
    %v484 = vsel %vm189, %v483, %v482
    %486 = vmatpush.msra.mxu0 %v121
    %487 = vmatpush.msra.mxu0 %v120
    %488 = vmatpush.msra.mxu0 %v119
    %489 = vmatpush.msra.mxu0 %v118
    %490 = vmatpush.msra.mxu0 %v117
    %491 = vmatpush.msra.mxu0 %v116
    %492 = vmatpush.msra.mxu0 %v115
    %493 = vmatpush.msra.mxu0 %v114
    %494 = vmatpush.msra.mxu0 %v113
    %495 = vmatpush.msra.mxu0 %v112
    %496 = vmatpush.msra.mxu0 %v111
    %497 = vmatpush.msra.mxu0 %v110
    %498 = vmatpush.msra.mxu0 %v109
    %499 = vmatpush.msra.mxu0 %v108
    %500 = vmatpush.msra.mxu0 %v107
    %501 = vmatpush.msra.mxu0 %v106
    %502 = vmatmul.f32.gmra.mxu0 %v484
    %v503 = vpop.f32.mrf.mxu0
    %v504 = vadd.f32 0.0, %v503
    %505 = vdwg.mxu0
    %v507 = vrot.slane %v504, 4
    %v508 = vrot.slane %v504, 5
    %v511 = vadd.f32 %v101, %v507
    %v512 = vadd.f32 %v104, %v508
    %v513 = vmax.f32 %v511, 0.0
    %v514 = vmax.f32 %v512, 0.0
    %v517 = vrot.slane %v514, 7
    %vm518 = vcmask 1045509
    %v519 = vsel %vm518, %v517, %v513
    %v521 = vrot.slane %v481, 4
    %v522 = vrot.slane %v519, 4
    %v523 = vrot.slane %v521, 4
    %526 = vmatpush.msra.mxu0 %v137
    %527 = vmatpush.msra.mxu0 %v136
    %528 = vmatpush.msra.mxu0 %v135
    %529 = vmatpush.msra.mxu0 %v134
    %530 = vmatpush.msra.mxu0 %v133
    %531 = vmatpush.msra.mxu0 %v132
    %532 = vmatpush.msra.mxu0 %v131
    %533 = vmatpush.msra.mxu0 %v130
    %534 = vmatpush.msra.mxu0 %v129
    %535 = vmatpush.msra.mxu0 %v128
    %536 = vmatpush.msra.mxu0 %v127
    %537 = vmatpush.msra.mxu0 %v126
    %538 = vmatpush.msra.mxu0 %v125
    %539 = vmatpush.msra.mxu0 %v124
    %540 = vmatpush.msra.mxu0 %v123
    %541 = vmatpush.msra.mxu0 %v122
    %542 = vmatmul.f32.gmra.mxu0 %v522
    %v543 = vpop.f32.mrf.mxu0
    %v544 = vadd.f32 %v156, %v543
    %545 = vdwg.mxu0
    %546 = vmatpush.msra.mxu0 %v153
    %547 = vmatpush.msra.mxu0 %v152
    %548 = vmatpush.msra.mxu0 %v151
    %549 = vmatpush.msra.mxu0 %v150
    %550 = vmatpush.msra.mxu0 %v149
    %551 = vmatpush.msra.mxu0 %v148
    %552 = vmatpush.msra.mxu0 %v147
    %553 = vmatpush.msra.mxu0 %v146
    %554 = vmatpush.msra.mxu0 %v145
    %555 = vmatpush.msra.mxu0 %v144
    %556 = vmatpush.msra.mxu0 %v143
    %557 = vmatpush.msra.mxu0 %v142
    %558 = vmatpush.msra.mxu0 %v141
    %559 = vmatpush.msra.mxu0 %v140
    %560 = vmatpush.msra.mxu0 %v139
    %561 = vmatpush.msra.mxu0 %v138
    %562 = vmatmul.f32.gmra.mxu0 %v523
    %v563 = vpop.f32.mrf.mxu0
    %v564 = vadd.f32 %v544, %v563
    %565 = vdwg.mxu0
    %v566 = vmax.f32 %v564, 0.0
    %v567 = vrot.slane %v513, 4
    %v568 = vrot.slane %v514, 3
    %v569 = vsel %vm189, %v568, %v567
    %571 = vmatpush.msra.mxu0 %v121
    %572 = vmatpush.msra.mxu0 %v120
    %573 = vmatpush.msra.mxu0 %v119
    %574 = vmatpush.msra.mxu0 %v118
    %575 = vmatpush.msra.mxu0 %v117
    %576 = vmatpush.msra.mxu0 %v116
    %577 = vmatpush.msra.mxu0 %v115
    %578 = vmatpush.msra.mxu0 %v114
    %579 = vmatpush.msra.mxu0 %v113
    %580 = vmatpush.msra.mxu0 %v112
    %581 = vmatpush.msra.mxu0 %v111
    %582 = vmatpush.msra.mxu0 %v110
    %583 = vmatpush.msra.mxu0 %v109
    %584 = vmatpush.msra.mxu0 %v108
    %585 = vmatpush.msra.mxu0 %v107
    %586 = vmatpush.msra.mxu0 %v106
    %587 = vmatmul.f32.gmra.mxu0 %v569
    %v588 = vpop.f32.mrf.mxu0
    %v589 = vadd.f32 0.0, %v588
    %590 = vdwg.mxu0
    %v592 = vrot.slane %v589, 3
    %v593 = vrot.slane %v589, 4
    %v596 = vadd.f32 %v101, %v592
    %v597 = vadd.f32 %v104, %v593
    %v598 = vmax.f32 %v596, 0.0
    %v599 = vmax.f32 %v597, 0.0
    %v602 = vrot.slane %v599, 7
    %vm603 = vcmask 1046534
    %v604 = vsel %vm603, %v602, %v598
    %v606 = vrot.slane %v566, 3
    %v607 = vrot.slane %v604, 5
    %v608 = vrot.slane %v606, 5
    %611 = vmatpush.msra.mxu0 %v137
    %612 = vmatpush.msra.mxu0 %v136
    %613 = vmatpush.msra.mxu0 %v135
    %614 = vmatpush.msra.mxu0 %v134
    %615 = vmatpush.msra.mxu0 %v133
    %616 = vmatpush.msra.mxu0 %v132
    %617 = vmatpush.msra.mxu0 %v131
    %618 = vmatpush.msra.mxu0 %v130
    %619 = vmatpush.msra.mxu0 %v129
    %620 = vmatpush.msra.mxu0 %v128
    %621 = vmatpush.msra.mxu0 %v127
    %622 = vmatpush.msra.mxu0 %v126
    %623 = vmatpush.msra.mxu0 %v125
    %624 = vmatpush.msra.mxu0 %v124
    %625 = vmatpush.msra.mxu0 %v123
    %626 = vmatpush.msra.mxu0 %v122
    %627 = vmatmul.f32.gmra.mxu0 %v607
    %v628 = vpop.f32.mrf.mxu0
    %v629 = vadd.f32 %v156, %v628
    %630 = vdwg.mxu0
    %631 = vmatpush.msra.mxu0 %v153
    %632 = vmatpush.msra.mxu0 %v152
    %633 = vmatpush.msra.mxu0 %v151
    %634 = vmatpush.msra.mxu0 %v150
    %635 = vmatpush.msra.mxu0 %v149
    %636 = vmatpush.msra.mxu0 %v148
    %637 = vmatpush.msra.mxu0 %v147
    %638 = vmatpush.msra.mxu0 %v146
    %639 = vmatpush.msra.mxu0 %v145
    %640 = vmatpush.msra.mxu0 %v144
    %641 = vmatpush.msra.mxu0 %v143
    %642 = vmatpush.msra.mxu0 %v142
    %643 = vmatpush.msra.mxu0 %v141
    %644 = vmatpush.msra.mxu0 %v140
    %645 = vmatpush.msra.mxu0 %v139
    %646 = vmatpush.msra.mxu0 %v138
    %647 = vmatmul.f32.gmra.mxu0 %v608
    %v648 = vpop.f32.mrf.mxu0
    %v649 = vadd.f32 %v629, %v648
    %650 = vdwg.mxu0
    %v651 = vmax.f32 %v649, 0.0
    %v652 = vrot.slane %v598, 5
    %v653 = vrot.slane %v599, 4
    %v654 = vsel %vm189, %v653, %v652
    %656 = vmatpush.msra.mxu0 %v121
    %657 = vmatpush.msra.mxu0 %v120
    %658 = vmatpush.msra.mxu0 %v119
    %659 = vmatpush.msra.mxu0 %v118
    %660 = vmatpush.msra.mxu0 %v117
    %661 = vmatpush.msra.mxu0 %v116
    %662 = vmatpush.msra.mxu0 %v115
    %663 = vmatpush.msra.mxu0 %v114
    %664 = vmatpush.msra.mxu0 %v113
    %665 = vmatpush.msra.mxu0 %v112
    %666 = vmatpush.msra.mxu0 %v111
    %667 = vmatpush.msra.mxu0 %v110
    %668 = vmatpush.msra.mxu0 %v109
    %669 = vmatpush.msra.mxu0 %v108
    %670 = vmatpush.msra.mxu0 %v107
    %671 = vmatpush.msra.mxu0 %v106
    %672 = vmatmul.f32.gmra.mxu0 %v654
    %v673 = vpop.f32.mrf.mxu0
    %v674 = vadd.f32 0.0, %v673
    %675 = vdwg.mxu0
    %v677 = vrot.slane %v674, 2
    %v678 = vrot.slane %v674, 3
    %v681 = vadd.f32 %v101, %v677
    %v682 = vadd.f32 %v104, %v678
    %v683 = vmax.f32 %v681, 0.0
    %v684 = vmax.f32 %v682, 0.0
    %v687 = vrot.slane %v684, 7
    %vm688 = vcmask 1047559
    %v689 = vsel %vm688, %v687, %v683
    %v691 = vrot.slane %v651, 2
    %v692 = vrot.slane %v689, 6
    %v693 = vrot.slane %v691, 6
    %696 = vmatpush.msra.mxu0 %v137
    %697 = vmatpush.msra.mxu0 %v136
    %698 = vmatpush.msra.mxu0 %v135
    %699 = vmatpush.msra.mxu0 %v134
    %700 = vmatpush.msra.mxu0 %v133
    %701 = vmatpush.msra.mxu0 %v132
    %702 = vmatpush.msra.mxu0 %v131
    %703 = vmatpush.msra.mxu0 %v130
    %704 = vmatpush.msra.mxu0 %v129
    %705 = vmatpush.msra.mxu0 %v128
    %706 = vmatpush.msra.mxu0 %v127
    %707 = vmatpush.msra.mxu0 %v126
    %708 = vmatpush.msra.mxu0 %v125
    %709 = vmatpush.msra.mxu0 %v124
    %710 = vmatpush.msra.mxu0 %v123
    %711 = vmatpush.msra.mxu0 %v122
    %712 = vmatmul.f32.gmra.mxu0 %v692
    %v713 = vpop.f32.mrf.mxu0
    %v714 = vadd.f32 %v156, %v713
    %715 = vdwg.mxu0
    %716 = vmatpush.msra.mxu0 %v153
    %717 = vmatpush.msra.mxu0 %v152
    %718 = vmatpush.msra.mxu0 %v151
    %719 = vmatpush.msra.mxu0 %v150
    %720 = vmatpush.msra.mxu0 %v149
    %721 = vmatpush.msra.mxu0 %v148
    %722 = vmatpush.msra.mxu0 %v147
    %723 = vmatpush.msra.mxu0 %v146
    %724 = vmatpush.msra.mxu0 %v145
    %725 = vmatpush.msra.mxu0 %v144
    %726 = vmatpush.msra.mxu0 %v143
    %727 = vmatpush.msra.mxu0 %v142
    %728 = vmatpush.msra.mxu0 %v141
    %729 = vmatpush.msra.mxu0 %v140
    %730 = vmatpush.msra.mxu0 %v139
    %731 = vmatpush.msra.mxu0 %v138
    %732 = vmatmul.f32.gmra.mxu0 %v693
    %v733 = vpop.f32.mrf.mxu0
    %v734 = vadd.f32 %v714, %v733
    %735 = vdwg.mxu0
    %v736 = vmax.f32 %v734, 0.0
    %v737 = vrot.slane %v683, 6
    %v738 = vrot.slane %v684, 5
    %v739 = vsel %vm189, %v738, %v737
    %741 = vmatpush.msra.mxu0 %v121
    %742 = vmatpush.msra.mxu0 %v120
    %743 = vmatpush.msra.mxu0 %v119
    %744 = vmatpush.msra.mxu0 %v118
    %745 = vmatpush.msra.mxu0 %v117
    %746 = vmatpush.msra.mxu0 %v116
    %747 = vmatpush.msra.mxu0 %v115
    %748 = vmatpush.msra.mxu0 %v114
    %749 = vmatpush.msra.mxu0 %v113
    %750 = vmatpush.msra.mxu0 %v112
    %751 = vmatpush.msra.mxu0 %v111
    %752 = vmatpush.msra.mxu0 %v110
    %753 = vmatpush.msra.mxu0 %v109
    %754 = vmatpush.msra.mxu0 %v108
    %755 = vmatpush.msra.mxu0 %v107
    %756 = vmatpush.msra.mxu0 %v106
    %757 = vmatmul.f32.gmra.mxu0 %v739
    %v758 = vpop.f32.mrf.mxu0
    %v759 = vadd.f32 0.0, %v758
    %760 = vdwg.mxu0
    %v762 = vrot.slane %v759, 1
    %v763 = vrot.slane %v759, 2
    %v766 = vadd.f32 %v101, %v762
    %v767 = vadd.f32 %v104, %v763
    %v768 = vmax.f32 %v766, 0.0
    %v769 = vmax.f32 %v767, 0.0
    %v772 = vrot.slane %v769, 7
    %v774 = vrot.slane %v736, 1
    %vm775 = vcmask 1040384
    %v776 = vrot.slane %v768, 7
    %v777 = vrot.slane %v772, 7
    %v778 = vsel %vm775, %v776, %v777
    %v779 = vrot.slane %v774, 7
    %v780 = vsel %vm775, %v779, %v779
    %783 = vmatpush.msra.mxu0 %v137
    %784 = vmatpush.msra.mxu0 %v136
    %785 = vmatpush.msra.mxu0 %v135
    %786 = vmatpush.msra.mxu0 %v134
    %787 = vmatpush.msra.mxu0 %v133
    %788 = vmatpush.msra.mxu0 %v132
    %789 = vmatpush.msra.mxu0 %v131
    %790 = vmatpush.msra.mxu0 %v130
    %791 = vmatpush.msra.mxu0 %v129
    %792 = vmatpush.msra.mxu0 %v128
    %793 = vmatpush.msra.mxu0 %v127
    %794 = vmatpush.msra.mxu0 %v126
    %795 = vmatpush.msra.mxu0 %v125
    %796 = vmatpush.msra.mxu0 %v124
    %797 = vmatpush.msra.mxu0 %v123
    %798 = vmatpush.msra.mxu0 %v122
    %799 = vmatmul.f32.gmra.mxu0 %v778
    %v800 = vpop.f32.mrf.mxu0
    %v801 = vadd.f32 %v156, %v800
    %802 = vdwg.mxu0
    %803 = vmatpush.msra.mxu0 %v153
    %804 = vmatpush.msra.mxu0 %v152
    %805 = vmatpush.msra.mxu0 %v151
    %806 = vmatpush.msra.mxu0 %v150
    %807 = vmatpush.msra.mxu0 %v149
    %808 = vmatpush.msra.mxu0 %v148
    %809 = vmatpush.msra.mxu0 %v147
    %810 = vmatpush.msra.mxu0 %v146
    %811 = vmatpush.msra.mxu0 %v145
    %812 = vmatpush.msra.mxu0 %v144
    %813 = vmatpush.msra.mxu0 %v143
    %814 = vmatpush.msra.mxu0 %v142
    %815 = vmatpush.msra.mxu0 %v141
    %816 = vmatpush.msra.mxu0 %v140
    %817 = vmatpush.msra.mxu0 %v139
    %818 = vmatpush.msra.mxu0 %v138
    %819 = vmatmul.f32.gmra.mxu0 %v780
    %v820 = vpop.f32.mrf.mxu0
    %v821 = vadd.f32 %v801, %v820
    %822 = vdwg.mxu0
    %v823 = vmax.f32 %v821, 0.0
    %v824 = vld [vmem:[%s6] sm:$0xff]
    %v825 = vld [vmem:[%s6 + $0x8] sm:$0xff]
    %v826 = vld [vmem:[%s6 + $0x10] sm:$0xff]
    %v827 = vld [vmem:[%s6 + $0x18] sm:$0xff]
    %v828 = vld [vmem:[%s6 + $0x20] sm:$0xff]
    %v829 = vld [vmem:[%s6 + $0x28] sm:$0xff]
    %v830 = vld [vmem:[%s6 + $0x30] sm:$0xff]
    %v831 = vld [vmem:[%s6 + $0x38] sm:$0xff]
    %v832 = vld [vmem:[%s6 + $0x40] sm:$0xff]
    %v833 = vld [vmem:[%s6 + $0x48] sm:$0xff]
    %v834 = vld [vmem:[%s6 + $0x50] sm:$0xff]
    %v835 = vld [vmem:[%s6 + $0x58] sm:$0xff]
    %v836 = vld [vmem:[%s6 + $0x60] sm:$0xff]
    %v837 = vld [vmem:[%s6 + $0x68] sm:$0xff]
    %v838 = vld [vmem:[%s6 + $0x70] sm:$0xff]
    %v839 = vld [vmem:[%s6 + $0x78] sm:$0xff]
    %v840 = vld [vmem:[%s7] sm:$0x1]
    %v842 = vperm.slane %v840, 0
    %844 = vmatpush.msra.mxu0 %v839
    %845 = vmatpush.msra.mxu0 %v838
    %846 = vmatpush.msra.mxu0 %v837
    %847 = vmatpush.msra.mxu0 %v836
    %848 = vmatpush.msra.mxu0 %v835
    %849 = vmatpush.msra.mxu0 %v834
    %850 = vmatpush.msra.mxu0 %v833
    %851 = vmatpush.msra.mxu0 %v832
    %852 = vmatpush.msra.mxu0 %v831
    %853 = vmatpush.msra.mxu0 %v830
    %854 = vmatpush.msra.mxu0 %v829
    %855 = vmatpush.msra.mxu0 %v828
    %856 = vmatpush.msra.mxu0 %v827
    %857 = vmatpush.msra.mxu0 %v826
    %858 = vmatpush.msra.mxu0 %v825
    %859 = vmatpush.msra.mxu0 %v824
    %860 = vmatmul.f32.gmra.mxu0 %v823
    %v861 = vpop.f32.mrf.mxu0
    %v862 = vadd.f32 %v842, %v861
    %863 = vdwg.mxu0
    %vm864 = vcmask 74752
    %865 = vst.msk [vmem:[#allocation7] sm:$0x3] %vm864, %v862
    // Predicated region
    $region42: #{tpu_custom_call.1} parent=1 // pred_check
      _
    $region43: #{tpu_custom_call.1} parent=1 // pred_check_branch
      %867 = sbr.rel (0) target = $region45
    $region44: #{tpu_custom_call.1} parent=1 // pred_region
      %869 = vsyncadd [#allocation4], 0
      %s871 = sshll.u32 [#allocation7], 4
      %s872 = int_to_ptr.vmem [resolvable:$true] %s871
      %s873 = sshll.u32 %s8, 4
      %s874 = int_to_ptr.hbm [resolvable:$true] %s873
      %876 = dma.vmem_to_hbm [thread:$0]  %s872, 32, %s874, [#allocation4]
    $region45: #{tpu_custom_call.1} parent=1 // pred_fallthru
      _
    // Predicated region
    $region46: #{tpu_custom_call.1} parent=1 // pred_check
      _
    $region47: #{tpu_custom_call.1} parent=1 // pred_check_branch
      %878 = sbr.rel (0) target = $region49
    $region48: #{tpu_custom_call.1} parent=1 // pred_region
      %880 = dma.done [#allocation4], 32
    $region49: #{tpu_custom_call.1} parent=1 // pred_fallthru
      _
    %881 = vsyncpa [#allocation3], 1
    %882 = vsyncpa [#allocation6], 1
    %883 = vsyncpa [#allocation4], 1

</llo_original>
